<compile_context>
chip_gen: v5e
topology: v5e:2x2
jax: 0.10.0
libtpu: 0.0.40
codegen_flags: <defaults>
</compile_context>

<pallas_src>
import jax
import jax.numpy as jnp
from jax.experimental import pallas as pl
from jax.experimental.pallas import tpu as pltpu


def _round_up(x, m):
    return (x + m - 1) // m * m


def _pad_to(a, shape):
    pads = [(0, s - d) for d, s in zip(a.shape, shape)]
    return jnp.pad(a, pads)


def _make_kernel(head_chunk):
    def kernel(x_ref, wbb_ref, bbb_ref, w1_ref, b1_ref, w2_ref, b2_ref,
               out_ref, acc_ref):
        k = pl.program_id(1)

        @pl.when(k == 0)
        def _init():
            acc_ref[...] = jnp.zeros_like(acc_ref)

        # Backbone stand-in projection, K-tiled reduction:
        #   acc(f32, tm x embed_dim) += x_tile(bf16) @ wbb_tile(bf16, native 32 lanes)
        acc_ref[...] += jnp.dot(x_ref[...], wbb_ref[...],
                                preferred_element_type=jnp.float32)

        @pl.when(k == pl.num_programs(1) - 1)
        def _finalize():
            # features = backbone(x)        (tm, embed_dim), bias in f32
            feats = (acc_ref[...] + bbb_ref[...]).astype(jnp.bfloat16)
            hp = w1_ref.shape[1]
            out = jnp.zeros(out_ref.shape, jnp.float32)
            # mlp_head: Linear(embed_dim,512) + ReLU + Linear(512,num_classes)
            # Hidden dim processed in 128-lane chunks (static unroll) so live
            # f32 intermediates stay well under the 64-vreg file.
            for h0 in range(0, hp, head_chunk):
                h = jnp.dot(feats, w1_ref[:, h0:h0 + head_chunk],
                            preferred_element_type=jnp.float32)
                h = jnp.maximum(h + b1_ref[:, h0:h0 + head_chunk], 0.0)
                out = out + jnp.dot(h.astype(jnp.bfloat16),
                                    w2_ref[h0:h0 + head_chunk, :],
                                    preferred_element_type=jnp.float32)
            out_ref[...] = (out + b2_ref[...]).astype(out_ref.dtype)

    return kernel


def pack_params(params, *, tk=2048, k_align=256):
    """One-time weight packing (pad + bf16 cast), hoisted out of the per-call
    path so the kernel never re-reads f32 weights or re-pads them in HBM."""
    wbb, bbb, w1, b1, w2, b2 = params
    in_dim, embed_dim = wbb.shape
    hidden = w1.shape[1]
    num_classes = w2.shape[1]
    LANE = 128
    tk = max(k_align, min(tk, _round_up(in_dim, k_align)))
    Kp = _round_up(in_dim, tk)
    Hp = _round_up(hidden, LANE)
    Cp = _round_up(num_classes, LANE)
    bf16 = jnp.bfloat16
    return dict(
        # Dominant, memory-bound operand: keep its native 32-lane width.
        wbb=_pad_to(wbb, (Kp, embed_dim)).astype(bf16),
        bbb=bbb.reshape(1, embed_dim).astype(jnp.float32),
        w1=_pad_to(w1, (embed_dim, Hp)).astype(bf16),
        b1=_pad_to(b1.reshape(1, -1), (1, Hp)).astype(jnp.float32),
        w2=_pad_to(w2, (Hp, Cp)).astype(bf16),
        b2=_pad_to(b2.reshape(1, -1), (1, Cp)).astype(jnp.float32),
        dims=dict(in_dim=in_dim, embed_dim=embed_dim, hidden=hidden,
                  num_classes=num_classes, Kp=Kp, Hp=Hp, Cp=Cp, tk=tk),
    )


def dino_mlp_classifier(x_nchw, packed, *, tm=None, head_chunk=128):
    """x_nchw: (B, C, H, W) float32. `packed` from pack_params().
    Returns (B, num_classes) float32."""
    d = packed["dims"]
    in_dim, embed_dim = d["in_dim"], d["embed_dim"]
    Kp, Hp, Cp, tk = d["Kp"], d["Hp"], d["Cp"], d["tk"]
    num_classes = d["num_classes"]
    assert Hp % head_chunk == 0

    B = x_nchw.shape[0]
    x_flat = x_nchw.reshape(B, -1)            # glue: flatten NCHW in plain JAX
    assert x_flat.shape[1] == in_dim

    # Batch tiling: proportional to B (no 128-row pad for tiny batches); for
    # moderate batches pick >=2 tiles so v7x's two TensorCores both get work
    # via the "parallel" grid axis. 16-row granularity keeps bf16 sublane
    # packing legal.
    if tm is None:
        b16 = _round_up(max(B, 1), 16)
        if b16 <= 32:
            tm = b16
        elif b16 <= 512:
            tm = _round_up((b16 + 1) // 2, 16)
        else:
            tm = 256
    Bp = _round_up(B, tm)

    x_p = _pad_to(x_flat, (Bp, Kp)).astype(jnp.bfloat16)

    grid = (Bp // tm, Kp // tk)
    n_btiles = grid[0]

    # VMEM footprint (double-buffered streams + resident head weights +
    # scratch), with 128-lane padding of narrow dims as laid out in VMEM.
    vmem_est = (2 * tm * tk * 2                 # x tile, double-buffered bf16
                + 2 * tk * 128 * 2              # wbb tile (lanes pad in VMEM)
                + embed_dim * Hp * 2 + Hp * Cp * 2
                + (128 + Hp + Cp) * 4
                + tm * 128 * 4                  # f32 accumulator scratch
                + 2 * tm * Cp * 4)              # out tile, double-buffered f32
    vmem_limit = int(min(max(2 * vmem_est, 16 * 1024 * 1024),
                         48 * 1024 * 1024))

    flops = 2 * Bp * (Kp * embed_dim + embed_dim * Hp + Hp * Cp)
    bytes_accessed = (x_p.size * 2
                      + n_btiles * packed["wbb"].size * 2
                      + packed["w1"].size * 2 + packed["w2"].size * 2
                      + (packed["bbb"].size + packed["b1"].size
                         + packed["b2"].size) * 4
                      + Bp * Cp * 4)

    out_p = pl.pallas_call(
        _make_kernel(head_chunk),
        out_shape=jax.ShapeDtypeStruct((Bp, Cp), jnp.float32),
        grid_spec=pltpu.PrefetchScalarGridSpec(
            num_scalar_prefetch=0,
            grid=grid,
            in_specs=[
                pl.BlockSpec((tm, tk), lambda i, k: (i, k)),          # x (streamed)
                pl.BlockSpec((tk, embed_dim), lambda i, k: (k, 0)),   # wbb, native lanes (streamed)
                pl.BlockSpec((1, embed_dim), lambda i, k: (0, 0)),    # backbone bias (resident)
                pl.BlockSpec((embed_dim, Hp), lambda i, k: (0, 0)),   # w1 (resident)
                pl.BlockSpec((1, Hp), lambda i, k: (0, 0)),           # b1 (resident)
                pl.BlockSpec((Hp, Cp), lambda i, k: (0, 0)),          # w2 (resident)
                pl.BlockSpec((1, Cp), lambda i, k: (0, 0)),           # b2 (resident)
            ],
            out_specs=pl.BlockSpec((tm, Cp), lambda i, k: (i, 0)),
            scratch_shapes=[pltpu.VMEM((tm, embed_dim), jnp.float32)],
        ),
        compiler_params=pltpu.CompilerParams(
            dimension_semantics=("parallel", "arbitrary"),
            vmem_limit_bytes=vmem_limit,
        ),
        cost_estimate=pl.CostEstimate(
            flops=flops, transcendentals=0, bytes_accessed=bytes_accessed),
    )(x_p, packed["wbb"], packed["bbb"], packed["w1"], packed["b1"],
      packed["w2"], packed["b2"])

    return out_p[:B, :num_classes]


def init_params(key, in_dim, embed_dim, hidden, num_classes):
    k = jax.random.split(key, 6)
    scale = 0.02
    wbb = scale * jax.random.normal(k[0], (in_dim, embed_dim), jnp.float32)
    bbb = scale * jax.random.normal(k[1], (1, embed_dim), jnp.float32)
    w1 = scale * jax.random.normal(k[2], (embed_dim, hidden), jnp.float32)
    b1 = scale * jax.random.normal(k[3], (1, hidden), jnp.float32)
    w2 = scale * jax.random.normal(k[4], (hidden, num_classes), jnp.float32)
    b2 = scale * jax.random.normal(k[5], (1, num_classes), jnp.float32)
    return (wbb, bbb, w1, b1, w2, b2)


if __name__ == "__main__":
    B, C, H, W = 2, 4, 16, 16
    embed_dim = 32          # backbone.embed_dim (small synthetic value)
    hidden = 512            # fixed by the module: nn.Linear(embed_dim, 512)
    num_classes = 16

    key = jax.random.PRNGKey(0)
    kx, kp = jax.random.split(key)
    x = jax.random.normal(kx, (B, C, H, W), jnp.float32)
    params = init_params(kp, C * H * W, embed_dim, hidden, num_classes)

    # One-time weight packing (pad + bf16 cast), outside the per-call path.
    packed = pack_params(params, tk=2048)

    out = dino_mlp_classifier(x, packed)
    jax.block_until_ready(out)

    # bf16-consistent pure-JAX reference (matmuls in bf16, f32 accumulation).
    wbb, bbb, w1, b1, w2, b2 = params
    x_flat = x.reshape(B, -1)
    feats = jnp.dot(x_flat.astype(jnp.bfloat16), wbb.astype(jnp.bfloat16),
                    preferred_element_type=jnp.float32) + bbb
    h = jnp.maximum(jnp.dot(feats.astype(jnp.bfloat16), w1.astype(jnp.bfloat16),
                            preferred_element_type=jnp.float32) + b1, 0.0)
    ref = jnp.dot(h.astype(jnp.bfloat16), w2.astype(jnp.bfloat16),
                  preferred_element_type=jnp.float32) + b2

    assert out.shape == (B, num_classes)
    assert jnp.allclose(out, ref, atol=2e-2, rtol=2e-2)

    print("KERNEL_OK")
</pallas_src>

<mosaic_0001>
module attributes {stable_mosaic.version = 11 : i64} {
  func.func @kernel(%arg0: i32, %arg1: i32, %arg2: memref<16x1024xbf16, #tpu.memory_space<vmem>>, %arg3: memref<1024x32xbf16, #tpu.memory_space<vmem>>, %arg4: memref<1x32xf32, #tpu.memory_space<vmem>>, %arg5: memref<32x512xbf16, #tpu.memory_space<vmem>>, %arg6: memref<1x512xf32, #tpu.memory_space<vmem>>, %arg7: memref<512x128xbf16, #tpu.memory_space<vmem>>, %arg8: memref<1x128xf32, #tpu.memory_space<vmem>>, %arg9: memref<16x128xf32, #tpu.memory_space<vmem>>, %arg10: memref<16x32xf32, #tpu.memory_space<vmem>>) attributes {dimension_semantics = [#tpu.dimension_semantics<parallel>, #tpu.dimension_semantics<arbitrary>], iteration_bounds = array<i64: 1, 1>, scalar_prefetch = 0 : i64, scratch_operands = 1 : i64, tpu.core_type = #tpu.core_type<tc>, window_params = [{transform_indices = @transform_0, window_bounds = array<i64: 16, 1024>}, {transform_indices = @transform_1, window_bounds = array<i64: 1024, 32>}, {pipeline_mode = #tpu.pipeline_mode<synchronous>, transform_indices = @transform_2, window_bounds = array<i64: 1, 32>}, {pipeline_mode = #tpu.pipeline_mode<synchronous>, transform_indices = @transform_3, window_bounds = array<i64: 32, 512>}, {pipeline_mode = #tpu.pipeline_mode<synchronous>, transform_indices = @transform_4, window_bounds = array<i64: 1, 512>}, {pipeline_mode = #tpu.pipeline_mode<synchronous>, transform_indices = @transform_5, window_bounds = array<i64: 512, 128>}, {pipeline_mode = #tpu.pipeline_mode<synchronous>, transform_indices = @transform_6, window_bounds = array<i64: 1, 128>}, {transform_indices = @transform_7, window_bounds = array<i64: 16, 128>}]} {
    %c0_i32 = arith.constant 0 : i32
    %0 = arith.cmpi eq, %arg1, %c0_i32 : i32
    %1 = arith.extui %0 : i1 to i32
    %c0_i32_0 = arith.constant 0 : i32
    %2 = arith.cmpi ne, %1, %c0_i32_0 : i32
    scf.if %2 {
      %cst_10 = arith.constant 0.000000e+00 : f32
      %12 = vector.broadcast %cst_10 : f32 to vector<16x32xf32>
      %c0_11 = arith.constant 0 : index
      %c0_12 = arith.constant 0 : index
      %13 = vector.load %arg10[%c0_11, %c0_12] : memref<16x32xf32, #tpu.memory_space<vmem>>, vector<16x32xf32>
      tpu.vector_store %arg10[%c0_11, %c0_12], %12 {strides = array<i32>} : memref<16x32xf32, #tpu.memory_space<vmem>>, vector<16x32xf32>,
    } else {
    }
    %c0 = arith.constant 0 : index
    %c0_1 = arith.constant 0 : index
    %3 = vector.load %arg10[%c0, %c0_1] : memref<16x32xf32, #tpu.memory_space<vmem>>, vector<16x32xf32>
    %c0_2 = arith.constant 0 : index
    %c0_3 = arith.constant 0 : index
    %4 = vector.load %arg2[%c0_2, %c0_3] : memref<16x1024xbf16, #tpu.memory_space<vmem>>, vector<16x1024xbf16>
    %c0_4 = arith.constant 0 : index
    %c0_5 = arith.constant 0 : index
    %5 = vector.load %arg3[%c0_4, %c0_5] : memref<1024x32xbf16, #tpu.memory_space<vmem>>, vector<1024x32xbf16>
    %cst = arith.constant dense<0.000000e+00> : vector<16x32xf32>
    %6 = tpu.matmul %4, %5, %cst {dimension_numbers = #tpu.dot_dimension_numbers<[1], [0], [0], [1], [0, 0, 1, 1], [], []>} : vector<16x1024xbf16>, vector<1024x32xbf16>, vector<16x32xf32> -> vector<16x32xf32>
    %7 = arith.addf %3, %6 : vector<16x32xf32>
    %c0_6 = arith.constant 0 : index
    %c0_7 = arith.constant 0 : index
    %8 = vector.load %arg10[%c0_6, %c0_7] : memref<16x32xf32, #tpu.memory_space<vmem>>, vector<16x32xf32>
    tpu.vector_store %arg10[%c0_6, %c0_7], %7 {strides = array<i32>} : memref<16x32xf32, #tpu.memory_space<vmem>>, vector<16x32xf32>,
    %c0_i32_8 = arith.constant 0 : i32
    %9 = arith.cmpi eq, %arg1, %c0_i32_8 : i32
    %10 = arith.extui %9 : i1 to i32
    %c0_i32_9 = arith.constant 0 : i32
    %11 = arith.cmpi ne, %10, %c0_i32_9 : i32
    scf.if %11 {
      %c0_10 = arith.constant 0 : index
      %c0_11 = arith.constant 0 : index
      %12 = vector.load %arg10[%c0_10, %c0_11] : memref<16x32xf32, #tpu.memory_space<vmem>>, vector<16x32xf32>
      %c0_12 = arith.constant 0 : index
      %c0_13 = arith.constant 0 : index
      %13 = vector.load %arg4[%c0_12, %c0_13] : memref<1x32xf32, #tpu.memory_space<vmem>>, vector<1x32xf32>
      %14 = vector.broadcast %13 : vector<1x32xf32> to vector<16x32xf32>
      %15 = arith.addf %12, %14 : vector<16x32xf32>
      %16 = arith.truncf %15 : vector<16x32xf32> to vector<16x32xbf16>
      %cst_14 = arith.constant 0.000000e+00 : f32
      %17 = vector.broadcast %cst_14 : f32 to vector<16x128xf32>
      %c0_15 = arith.constant 0 : index
      %c0_16 = arith.constant 0 : index
      %18 = vector.load %arg5[%c0_15, %c0_16] : memref<32x512xbf16, #tpu.memory_space<vmem>>, vector<32x128xbf16>
      %cst_17 = arith.constant dense<0.000000e+00> : vector<16x128xf32>
      %19 = tpu.matmul %16, %18, %cst_17 {dimension_numbers = #tpu.dot_dimension_numbers<[1], [0], [0], [1], [0, 0, 1, 1], [], []>} : vector<16x32xbf16>, vector<32x128xbf16>, vector<16x128xf32> -> vector<16x128xf32>
      %c0_18 = arith.constant 0 : index
      %c0_19 = arith.constant 0 : index
      %20 = vector.load %arg6[%c0_18, %c0_19] : memref<1x512xf32, #tpu.memory_space<vmem>>, vector<1x128xf32>
      %21 = vector.broadcast %20 : vector<1x128xf32> to vector<16x128xf32>
      %22 = arith.addf %19, %21 : vector<16x128xf32>
      %cst_20 = arith.constant 0.000000e+00 : f32
      %23 = vector.broadcast %cst_20 : f32 to vector<16x128xf32>
      %24 = arith.maximumf %22, %23 : vector<16x128xf32>
      %25 = arith.truncf %24 : vector<16x128xf32> to vector<16x128xbf16>
      %c0_21 = arith.constant 0 : index
      %c0_22 = arith.constant 0 : index
      %26 = vector.load %arg7[%c0_21, %c0_22] : memref<512x128xbf16, #tpu.memory_space<vmem>>, vector<128x128xbf16>
      %cst_23 = arith.constant dense<0.000000e+00> : vector<16x128xf32>
      %27 = tpu.matmul %25, %26, %cst_23 {dimension_numbers = #tpu.dot_dimension_numbers<[1], [0], [0], [1], [0, 0, 1, 1], [], []>} : vector<16x128xbf16>, vector<128x128xbf16>, vector<16x128xf32> -> vector<16x128xf32>
      %28 = arith.addf %17, %27 : vector<16x128xf32>
      %c0_24 = arith.constant 0 : index
      %c128 = arith.constant 128 : index
      %29 = vector.load %arg5[%c0_24, %c128] : memref<32x512xbf16, #tpu.memory_space<vmem>>, vector<32x128xbf16>
      %cst_25 = arith.constant dense<0.000000e+00> : vector<16x128xf32>
      %30 = tpu.matmul %16, %29, %cst_25 {dimension_numbers = #tpu.dot_dimension_numbers<[1], [0], [0], [1], [0, 0, 1, 1], [], []>} : vector<16x32xbf16>, vector<32x128xbf16>, vector<16x128xf32> -> vector<16x128xf32>
      %c0_26 = arith.constant 0 : index
      %c128_27 = arith.constant 128 : index
      %31 = vector.load %arg6[%c0_26, %c128_27] : memref<1x512xf32, #tpu.memory_space<vmem>>, vector<1x128xf32>
      %32 = vector.broadcast %31 : vector<1x128xf32> to vector<16x128xf32>
      %33 = arith.addf %30, %32 : vector<16x128xf32>
      %cst_28 = arith.constant 0.000000e+00 : f32
      %34 = vector.broadcast %cst_28 : f32 to vector<16x128xf32>
      %35 = arith.maximumf %33, %34 : vector<16x128xf32>
      %36 = arith.truncf %35 : vector<16x128xf32> to vector<16x128xbf16>
      %c128_29 = arith.constant 128 : index
      %c0_30 = arith.constant 0 : index
      %37 = vector.load %arg7[%c128_29, %c0_30] : memref<512x128xbf16, #tpu.memory_space<vmem>>, vector<128x128xbf16>
      %cst_31 = arith.constant dense<0.000000e+00> : vector<16x128xf32>
      %38 = tpu.matmul %36, %37, %cst_31 {dimension_numbers = #tpu.dot_dimension_numbers<[1], [0], [0], [1], [0, 0, 1, 1], [], []>} : vector<16x128xbf16>, vector<128x128xbf16>, vector<16x128xf32> -> vector<16x128xf32>
      %39 = arith.addf %28, %38 : vector<16x128xf32>
      %c0_32 = arith.constant 0 : index
      %c256 = arith.constant 256 : index
      %40 = vector.load %arg5[%c0_32, %c256] : memref<32x512xbf16, #tpu.memory_space<vmem>>, vector<32x128xbf16>
      %cst_33 = arith.constant dense<0.000000e+00> : vector<16x128xf32>
      %41 = tpu.matmul %16, %40, %cst_33 {dimension_numbers = #tpu.dot_dimension_numbers<[1], [0], [0], [1], [0, 0, 1, 1], [], []>} : vector<16x32xbf16>, vector<32x128xbf16>, vector<16x128xf32> -> vector<16x128xf32>
      %c0_34 = arith.constant 0 : index
      %c256_35 = arith.constant 256 : index
      %42 = vector.load %arg6[%c0_34, %c256_35] : memref<1x512xf32, #tpu.memory_space<vmem>>, vector<1x128xf32>
      %43 = vector.broadcast %42 : vector<1x128xf32> to vector<16x128xf32>
      %44 = arith.addf %41, %43 : vector<16x128xf32>
      %cst_36 = arith.constant 0.000000e+00 : f32
      %45 = vector.broadcast %cst_36 : f32 to vector<16x128xf32>
      %46 = arith.maximumf %44, %45 : vector<16x128xf32>
      %47 = arith.truncf %46 : vector<16x128xf32> to vector<16x128xbf16>
      %c256_37 = arith.constant 256 : index
      %c0_38 = arith.constant 0 : index
      %48 = vector.load %arg7[%c256_37, %c0_38] : memref<512x128xbf16, #tpu.memory_space<vmem>>, vector<128x128xbf16>
      %cst_39 = arith.constant dense<0.000000e+00> : vector<16x128xf32>
      %49 = tpu.matmul %47, %48, %cst_39 {dimension_numbers = #tpu.dot_dimension_numbers<[1], [0], [0], [1], [0, 0, 1, 1], [], []>} : vector<16x128xbf16>, vector<128x128xbf16>, vector<16x128xf32> -> vector<16x128xf32>
      %50 = arith.addf %39, %49 : vector<16x128xf32>
      %c0_40 = arith.constant 0 : index
      %c384 = arith.constant 384 : index
      %51 = vector.load %arg5[%c0_40, %c384] : memref<32x512xbf16, #tpu.memory_space<vmem>>, vector<32x128xbf16>
      %cst_41 = arith.constant dense<0.000000e+00> : vector<16x128xf32>
      %52 = tpu.matmul %16, %51, %cst_41 {dimension_numbers = #tpu.dot_dimension_numbers<[1], [0], [0], [1], [0, 0, 1, 1], [], []>} : vector<16x32xbf16>, vector<32x128xbf16>, vector<16x128xf32> -> vector<16x128xf32>
      %c0_42 = arith.constant 0 : index
      %c384_43 = arith.constant 384 : index
      %53 = vector.load %arg6[%c0_42, %c384_43] : memref<1x512xf32, #tpu.memory_space<vmem>>, vector<1x128xf32>
      %54 = vector.broadcast %53 : vector<1x128xf32> to vector<16x128xf32>
      %55 = arith.addf %52, %54 : vector<16x128xf32>
      %cst_44 = arith.constant 0.000000e+00 : f32
      %56 = vector.broadcast %cst_44 : f32 to vector<16x128xf32>
      %57 = arith.maximumf %55, %56 : vector<16x128xf32>
      %58 = arith.truncf %57 : vector<16x128xf32> to vector<16x128xbf16>
      %c384_45 = arith.constant 384 : index
      %c0_46 = arith.constant 0 : index
      %59 = vector.load %arg7[%c384_45, %c0_46] : memref<512x128xbf16, #tpu.memory_space<vmem>>, vector<128x128xbf16>
      %cst_47 = arith.constant dense<0.000000e+00> : vector<16x128xf32>
      %60 = tpu.matmul %58, %59, %cst_47 {dimension_numbers = #tpu.dot_dimension_numbers<[1], [0], [0], [1], [0, 0, 1, 1], [], []>} : vector<16x128xbf16>, vector<128x128xbf16>, vector<16x128xf32> -> vector<16x128xf32>
      %61 = arith.addf %50, %60 : vector<16x128xf32>
      %c0_48 = arith.constant 0 : index
      %c0_49 = arith.constant 0 : index
      %62 = vector.load %arg8[%c0_48, %c0_49] : memref<1x128xf32, #tpu.memory_space<vmem>>, vector<1x128xf32>
      %63 = vector.broadcast %62 : vector<1x128xf32> to vector<16x128xf32>
      %64 = arith.addf %61, %63 : vector<16x128xf32>
      %c0_50 = arith.constant 0 : index
      %c0_51 = arith.constant 0 : index
      %65 = vector.load %arg9[%c0_50, %c0_51] : memref<16x128xf32, #tpu.memory_space<vmem>>, vector<16x128xf32>
      tpu.vector_store %arg9[%c0_50, %c0_51], %64 {strides = array<i32>} : memref<16x128xf32, #tpu.memory_space<vmem>>, vector<16x128xf32>,
    } else {
    }
    return
  }
  func.func @transform_0(%arg0: i32, %arg1: i32) -> (i32, i32) {
    %c0_i32 = arith.constant 0 : i32
    return %arg0, %arg1 : i32, i32
  }
  func.func @transform_1(%arg0: i32, %arg1: i32) -> (i32, i32) {
    %c0_i32 = arith.constant 0 : i32
    %c0_i32_0 = arith.constant 0 : i32
    return %arg1, %c0_i32 : i32, i32
  }
  func.func @transform_2(%arg0: i32, %arg1: i32) -> (i32, i32) {
    %c0_i32 = arith.constant 0 : i32
    %c0_i32_0 = arith.constant 0 : i32
    %c0_i32_1 = arith.constant 0 : i32
    return %c0_i32, %c0_i32_0 : i32, i32
  }
  func.func @transform_3(%arg0: i32, %arg1: i32) -> (i32, i32) {
    %c0_i32 = arith.constant 0 : i32
    %c0_i32_0 = arith.constant 0 : i32
    %c0_i32_1 = arith.constant 0 : i32
    return %c0_i32, %c0_i32_0 : i32, i32
  }
  func.func @transform_4(%arg0: i32, %arg1: i32) -> (i32, i32) {
    %c0_i32 = arith.constant 0 : i32
    %c0_i32_0 = arith.constant 0 : i32
    %c0_i32_1 = arith.constant 0 : i32
    return %c0_i32, %c0_i32_0 : i32, i32
  }
  func.func @transform_5(%arg0: i32, %arg1: i32) -> (i32, i32) {
    %c0_i32 = arith.constant 0 : i32
    %c0_i32_0 = arith.constant 0 : i32
    %c0_i32_1 = arith.constant 0 : i32
    return %c0_i32, %c0_i32_0 : i32, i32
  }
  func.func @transform_6(%arg0: i32, %arg1: i32) -> (i32, i32) {
    %c0_i32 = arith.constant 0 : i32
    %c0_i32_0 = arith.constant 0 : i32
    %c0_i32_1 = arith.constant 0 : i32
    return %c0_i32, %c0_i32_0 : i32, i32
  }
  func.func @transform_7(%arg0: i32, %arg1: i32) -> (i32, i32) {
    %c0_i32 = arith.constant 0 : i32
    %c0_i32_0 = arith.constant 0 : i32
    return %arg0, %c0_i32 : i32, i32
  }
}

</mosaic_0001>

<llo_original>
// kernel: tpu_custom_call.1
$region0: #{tpu_custom_call.1}
  #allocation0 [shape = 'u32[]', space=smem, size = 0x4, offset = 0x4, fixed_abs, tag = 'smem constant byte address 0x4 - core index']
  #allocation1 [shape = 'u32[72,128]{1,0:T(1,128)}', space=vmem, size = 0x9000, scoped, tag = 'internal scratch']
  #allocation2 [shape = 'f32[16,32]{1,0:T(8,128)}', space=vmem, size = 0x2000, scoped, tag = 'scratch operand']
  %s0 = inlined_call_operand.vmem [shape: bf16[16,1024], index: 0, kind: input, shape index: {}]
  %s1 = inlined_call_operand.vmem [shape: bf16[1024,32], index: 1, kind: input, shape index: {}]
  %s2 = inlined_call_operand.vmem [shape: f32[1,32], index: 2, kind: input, shape index: {}]
  %s3 = inlined_call_operand.vmem [shape: bf16[32,512], index: 3, kind: input, shape index: {}]
  %s4 = inlined_call_operand.vmem [shape: f32[1,512], index: 4, kind: input, shape index: {}]
  %s5 = inlined_call_operand.vmem [shape: bf16[512,128], index: 5, kind: input, shape index: {}]
  %s6 = inlined_call_operand.vmem [shape: f32[1,128], index: 6, kind: input, shape index: {}]
  %s7 = inlined_call_operand.hbm [shape: f32[16,128], index: 7, kind: output, shape index: {}]
  %s8 = sld [smem:[#allocation0]]
  $region46: #{tpu_custom_call.1} parent=0
    _
  %s10 = ssub.s32 1, %s8
  %s11 = scalar_select 0, %s10, %s8
  $region1: #{tpu_custom_call.1} parent=0
    #allocation3 [shape = 'u8[8192]{0}', space=vmem, size = 0x2000, scoped, tag = 'output window, operand 0, single buffered']
    #allocation4 [shape = 's32[1]{0}', space=sflag, size = 0x4, scoped, tag = 'scoped memory for tpu_custom_call.1']
    %12 = vsyncpa [#allocation4], 0
    // Predicated region
    $region2: #{tpu_custom_call.1} parent=1 // pred_check
      _
    $region3: #{tpu_custom_call.1} parent=1 // pred_check_branch
      %14 = sbr.rel (0) target = $region5
    $region4: #{tpu_custom_call.1} parent=1 // pred_region
      _
    $region5: #{tpu_custom_call.1} parent=1 // pred_fallthru
      _
    // Predicated region
    $region6: #{tpu_custom_call.1} parent=1 // pred_check
      _
    $region7: #{tpu_custom_call.1} parent=1 // pred_check_branch
      %16 = sbr.rel (0) target = $region9
    $region8: #{tpu_custom_call.1} parent=1 // pred_region
      _
    $region9: #{tpu_custom_call.1} parent=1 // pred_fallthru
      _
    // Predicated region
    $region10: #{tpu_custom_call.1} parent=1 // pred_check
      _
    $region11: #{tpu_custom_call.1} parent=1 // pred_check_branch
      %18 = sbr.rel (0) target = $region13
    $region12: #{tpu_custom_call.1} parent=1 // pred_region
      _
    $region13: #{tpu_custom_call.1} parent=1 // pred_fallthru
      _
    // Predicated region
    $region14: #{tpu_custom_call.1} parent=1 // pred_check
      _
    $region15: #{tpu_custom_call.1} parent=1 // pred_check_branch
      %20 = sbr.rel (0) target = $region17
    $region16: #{tpu_custom_call.1} parent=1 // pred_region
      _
    $region17: #{tpu_custom_call.1} parent=1 // pred_fallthru
      _
    // Predicated region
    $region18: #{tpu_custom_call.1} parent=1 // pred_check
      _
    $region19: #{tpu_custom_call.1} parent=1 // pred_check_branch
      %22 = sbr.rel (0) target = $region21
    $region20: #{tpu_custom_call.1} parent=1 // pred_region
      _
    $region21: #{tpu_custom_call.1} parent=1 // pred_fallthru
      _
    // Predicated region
    $region22: #{tpu_custom_call.1} parent=1 // pred_check
      _
    $region23: #{tpu_custom_call.1} parent=1 // pred_check_branch
      %24 = sbr.rel (0) target = $region25
    $region24: #{tpu_custom_call.1} parent=1 // pred_region
      _
    $region25: #{tpu_custom_call.1} parent=1 // pred_fallthru
      _
    // Predicated region
    $region26: #{tpu_custom_call.1} parent=1 // pred_check
      _
    $region27: #{tpu_custom_call.1} parent=1 // pred_check_branch
      %26 = sbr.rel (0) target = $region29
    $region28: #{tpu_custom_call.1} parent=1 // pred_region
      _
    $region29: #{tpu_custom_call.1} parent=1 // pred_fallthru
      _
    %p28 = scmp.eq.s32.totalorder 0, 0
    // Predicated region
    $region30: #{tpu_custom_call.1} parent=1 // pred_check
      %p29 = pneg %p28
    $region31: #{tpu_custom_call.1} parent=1 // pred_check_branch
      %31 = sbr.rel (%p29) target = $region33
    $region32: #{tpu_custom_call.1} parent=1 // pred_region
      %vm32 = vcmask 261120
      %33 = vst.msk [vmem:[#allocation2] sm:$0xff] %vm32, 0.0
      %34 = vst.msk [vmem:[#allocation2 + $0x8] sm:$0xff] %vm32, 0.0
    $region33: #{tpu_custom_call.1} parent=1 // pred_fallthru
      _
    %v35 = vld [vmem:[#allocation2] sm:$0xff]
    %v36 = vld [vmem:[#allocation2 + $0x8] sm:$0xff]
    %v37 = vld [vmem:[%s0] sm:$0xff]
    %v38 = vld [vmem:[%s0 + $0x8] sm:$0xff]
    %v39 = vld [vmem:[%s0 + $0x10] sm:$0xff]
    %v40 = vld [vmem:[%s0 + $0x18] sm:$0xff]
    %v41 = vld [vmem:[%s0 + $0x20] sm:$0xff]
    %v42 = vld [vmem:[%s0 + $0x28] sm:$0xff]
    %v43 = vld [vmem:[%s0 + $0x30] sm:$0xff]
    %v44 = vld [vmem:[%s0 + $0x38] sm:$0xff]
    %v45 = vld [vmem:[%s1] sm:$0xf]
    %v46 = vld [vmem:[%s1 + $0x4] sm:$0xf]
    %v47 = vld [vmem:[%s1 + $0x8] sm:$0xf]
    %v48 = vld [vmem:[%s1 + $0xc] sm:$0xf]
    %v49 = vld [vmem:[%s1 + $0x10] sm:$0xf]
    %v50 = vld [vmem:[%s1 + $0x14] sm:$0xf]
    %v51 = vld [vmem:[%s1 + $0x18] sm:$0xf]
    %v52 = vld [vmem:[%s1 + $0x1c] sm:$0xf]
    %v53 = vld [vmem:[%s1 + $0x20] sm:$0xf]
    %v54 = vld [vmem:[%s1 + $0x24] sm:$0xf]
    %v55 = vld [vmem:[%s1 + $0x28] sm:$0xf]
    %v56 = vld [vmem:[%s1 + $0x2c] sm:$0xf]
    %v57 = vld [vmem:[%s1 + $0x30] sm:$0xf]
    %v58 = vld [vmem:[%s1 + $0x34] sm:$0xf]
    %v59 = vld [vmem:[%s1 + $0x38] sm:$0xf]
    %v60 = vld [vmem:[%s1 + $0x3c] sm:$0xf]
    %v61 = vld [vmem:[%s1 + $0x40] sm:$0xf]
    %v62 = vld [vmem:[%s1 + $0x44] sm:$0xf]
    %v63 = vld [vmem:[%s1 + $0x48] sm:$0xf]
    %v64 = vld [vmem:[%s1 + $0x4c] sm:$0xf]
    %v65 = vld [vmem:[%s1 + $0x50] sm:$0xf]
    %v66 = vld [vmem:[%s1 + $0x54] sm:$0xf]
    %v67 = vld [vmem:[%s1 + $0x58] sm:$0xf]
    %v68 = vld [vmem:[%s1 + $0x5c] sm:$0xf]
    %v69 = vld [vmem:[%s1 + $0x60] sm:$0xf]
    %v70 = vld [vmem:[%s1 + $0x64] sm:$0xf]
    %v71 = vld [vmem:[%s1 + $0x68] sm:$0xf]
    %v72 = vld [vmem:[%s1 + $0x6c] sm:$0xf]
    %v73 = vld [vmem:[%s1 + $0x70] sm:$0xf]
    %v74 = vld [vmem:[%s1 + $0x74] sm:$0xf]
    %v75 = vld [vmem:[%s1 + $0x78] sm:$0xf]
    %v76 = vld [vmem:[%s1 + $0x7c] sm:$0xf]
    %v77 = vld [vmem:[%s1 + $0x80] sm:$0xf]
    %v78 = vld [vmem:[%s1 + $0x84] sm:$0xf]
    %v79 = vld [vmem:[%s1 + $0x88] sm:$0xf]
    %v80 = vld [vmem:[%s1 + $0x8c] sm:$0xf]
    %v81 = vld [vmem:[%s1 + $0x90] sm:$0xf]
    %v82 = vld [vmem:[%s1 + $0x94] sm:$0xf]
    %v83 = vld [vmem:[%s1 + $0x98] sm:$0xf]
    %v84 = vld [vmem:[%s1 + $0x9c] sm:$0xf]
    %v85 = vld [vmem:[%s1 + $0xa0] sm:$0xf]
    %v86 = vld [vmem:[%s1 + $0xa4] sm:$0xf]
    %v87 = vld [vmem:[%s1 + $0xa8] sm:$0xf]
    %v88 = vld [vmem:[%s1 + $0xac] sm:$0xf]
    %v89 = vld [vmem:[%s1 + $0xb0] sm:$0xf]
    %v90 = vld [vmem:[%s1 + $0xb4] sm:$0xf]
    %v91 = vld [vmem:[%s1 + $0xb8] sm:$0xf]
    %v92 = vld [vmem:[%s1 + $0xbc] sm:$0xf]
    %v93 = vld [vmem:[%s1 + $0xc0] sm:$0xf]
    %v94 = vld [vmem:[%s1 + $0xc4] sm:$0xf]
    %v95 = vld [vmem:[%s1 + $0xc8] sm:$0xf]
    %v96 = vld [vmem:[%s1 + $0xcc] sm:$0xf]
    %v97 = vld [vmem:[%s1 + $0xd0] sm:$0xf]
    %v98 = vld [vmem:[%s1 + $0xd4] sm:$0xf]
    %v99 = vld [vmem:[%s1 + $0xd8] sm:$0xf]
    %v100 = vld [vmem:[%s1 + $0xdc] sm:$0xf]
    %v101 = vld [vmem:[%s1 + $0xe0] sm:$0xf]
    %v102 = vld [vmem:[%s1 + $0xe4] sm:$0xf]
    %v103 = vld [vmem:[%s1 + $0xe8] sm:$0xf]
    %v104 = vld [vmem:[%s1 + $0xec] sm:$0xf]
    %v105 = vld [vmem:[%s1 + $0xf0] sm:$0xf]
    %v106 = vld [vmem:[%s1 + $0xf4] sm:$0xf]
    %v107 = vld [vmem:[%s1 + $0xf8] sm:$0xf]
    %v108 = vld [vmem:[%s1 + $0xfc] sm:$0xf]
    %v109 = vld [vmem:[%s1 + $0x100] sm:$0xf]
    %v110 = vld [vmem:[%s1 + $0x104] sm:$0xf]
    %v111 = vld [vmem:[%s1 + $0x108] sm:$0xf]
    %v112 = vld [vmem:[%s1 + $0x10c] sm:$0xf]
    %v113 = vld [vmem:[%s1 + $0x110] sm:$0xf]
    %v114 = vld [vmem:[%s1 + $0x114] sm:$0xf]
    %v115 = vld [vmem:[%s1 + $0x118] sm:$0xf]
    %v116 = vld [vmem:[%s1 + $0x11c] sm:$0xf]
    %v117 = vld [vmem:[%s1 + $0x120] sm:$0xf]
    %v118 = vld [vmem:[%s1 + $0x124] sm:$0xf]
    %v119 = vld [vmem:[%s1 + $0x128] sm:$0xf]
    %v120 = vld [vmem:[%s1 + $0x12c] sm:$0xf]
    %v121 = vld [vmem:[%s1 + $0x130] sm:$0xf]
    %v122 = vld [vmem:[%s1 + $0x134] sm:$0xf]
    %v123 = vld [vmem:[%s1 + $0x138] sm:$0xf]
    %v124 = vld [vmem:[%s1 + $0x13c] sm:$0xf]
    %v125 = vld [vmem:[%s1 + $0x140] sm:$0xf]
    %v126 = vld [vmem:[%s1 + $0x144] sm:$0xf]
    %v127 = vld [vmem:[%s1 + $0x148] sm:$0xf]
    %v128 = vld [vmem:[%s1 + $0x14c] sm:$0xf]
    %v129 = vld [vmem:[%s1 + $0x150] sm:$0xf]
    %v130 = vld [vmem:[%s1 + $0x154] sm:$0xf]
    %v131 = vld [vmem:[%s1 + $0x158] sm:$0xf]
    %v132 = vld [vmem:[%s1 + $0x15c] sm:$0xf]
    %v133 = vld [vmem:[%s1 + $0x160] sm:$0xf]
    %v134 = vld [vmem:[%s1 + $0x164] sm:$0xf]
    %v135 = vld [vmem:[%s1 + $0x168] sm:$0xf]
    %v136 = vld [vmem:[%s1 + $0x16c] sm:$0xf]
    %v137 = vld [vmem:[%s1 + $0x170] sm:$0xf]
    %v138 = vld [vmem:[%s1 + $0x174] sm:$0xf]
    %v139 = vld [vmem:[%s1 + $0x178] sm:$0xf]
    %v140 = vld [vmem:[%s1 + $0x17c] sm:$0xf]
    %v141 = vld [vmem:[%s1 + $0x180] sm:$0xf]
    %v142 = vld [vmem:[%s1 + $0x184] sm:$0xf]
    %v143 = vld [vmem:[%s1 + $0x188] sm:$0xf]
    %v144 = vld [vmem:[%s1 + $0x18c] sm:$0xf]
    %v145 = vld [vmem:[%s1 + $0x190] sm:$0xf]
    %v146 = vld [vmem:[%s1 + $0x194] sm:$0xf]
    %v147 = vld [vmem:[%s1 + $0x198] sm:$0xf]
    %v148 = vld [vmem:[%s1 + $0x19c] sm:$0xf]
    %v149 = vld [vmem:[%s1 + $0x1a0] sm:$0xf]
    %v150 = vld [vmem:[%s1 + $0x1a4] sm:$0xf]
    %v151 = vld [vmem:[%s1 + $0x1a8] sm:$0xf]
    %v152 = vld [vmem:[%s1 + $0x1ac] sm:$0xf]
    %v153 = vld [vmem:[%s1 + $0x1b0] sm:$0xf]
    %v154 = vld [vmem:[%s1 + $0x1b4] sm:$0xf]
    %v155 = vld [vmem:[%s1 + $0x1b8] sm:$0xf]
    %v156 = vld [vmem:[%s1 + $0x1bc] sm:$0xf]
    %v157 = vld [vmem:[%s1 + $0x1c0] sm:$0xf]
    %v158 = vld [vmem:[%s1 + $0x1c4] sm:$0xf]
    %v159 = vld [vmem:[%s1 + $0x1c8] sm:$0xf]
    %v160 = vld [vmem:[%s1 + $0x1cc] sm:$0xf]
    %v161 = vld [vmem:[%s1 + $0x1d0] sm:$0xf]
    %v162 = vld [vmem:[%s1 + $0x1d4] sm:$0xf]
    %v163 = vld [vmem:[%s1 + $0x1d8] sm:$0xf]
    %v164 = vld [vmem:[%s1 + $0x1dc] sm:$0xf]
    %v165 = vld [vmem:[%s1 + $0x1e0] sm:$0xf]
    %v166 = vld [vmem:[%s1 + $0x1e4] sm:$0xf]
    %v167 = vld [vmem:[%s1 + $0x1e8] sm:$0xf]
    %v168 = vld [vmem:[%s1 + $0x1ec] sm:$0xf]
    %v169 = vld [vmem:[%s1 + $0x1f0] sm:$0xf]
    %v170 = vld [vmem:[%s1 + $0x1f4] sm:$0xf]
    %v171 = vld [vmem:[%s1 + $0x1f8] sm:$0xf]
    %v172 = vld [vmem:[%s1 + $0x1fc] sm:$0xf]
    %v181 = vunpack.c.l.b16 %v37
    %v182 = vunpack.c.h.b16 %v37
    %v183 = vunpack.c.l.b16 %v38
    %v184 = vunpack.c.h.b16 %v38
    %v185 = vunpack.c.l.b16 %v39
    %v186 = vunpack.c.h.b16 %v39
    %v187 = vunpack.c.l.b16 %v40
    %v188 = vunpack.c.h.b16 %v40
    %v189 = vunpack.c.l.b16 %v41
    %v190 = vunpack.c.h.b16 %v41
    %v191 = vunpack.c.l.b16 %v42
    %v192 = vunpack.c.h.b16 %v42
    %v193 = vunpack.c.l.b16 %v43
    %v194 = vunpack.c.h.b16 %v43
    %v195 = vunpack.c.l.b16 %v44
    %v196 = vunpack.c.h.b16 %v44
    %v197 = vpack.c.b16 %v189, %v181
    %v198 = vpack.c.b16 %v190, %v182
    %v199 = vpack.c.b16 %v191, %v183
    %v200 = vpack.c.b16 %v192, %v184
    %v201 = vpack.c.b16 %v193, %v185
    %v202 = vpack.c.b16 %v194, %v186
    %v203 = vpack.c.b16 %v195, %v187
    %v204 = vpack.c.b16 %v196, %v188
    %v341 = vunpack.c.l.b16 %v45
    %v342 = vunpack.c.l.b16 %v46
    %v343 = vunpack.c.l.b16 %v47
    %v344 = vunpack.c.l.b16 %v48
    %v345 = vunpack.c.l.b16 %v49
    %v346 = vunpack.c.l.b16 %v50
    %v347 = vunpack.c.l.b16 %v51
    %v348 = vunpack.c.l.b16 %v52
    %v349 = vunpack.c.l.b16 %v53
    %v350 = vunpack.c.l.b16 %v54
    %v351 = vunpack.c.l.b16 %v55
    %v352 = vunpack.c.l.b16 %v56
    %v353 = vunpack.c.l.b16 %v57
    %v354 = vunpack.c.l.b16 %v58
    %v355 = vunpack.c.l.b16 %v59
    %v356 = vunpack.c.l.b16 %v60
    %v357 = vunpack.c.l.b16 %v61
    %v358 = vunpack.c.l.b16 %v62
    %v359 = vunpack.c.l.b16 %v63
    %v360 = vunpack.c.l.b16 %v64
    %v361 = vunpack.c.l.b16 %v65
    %v362 = vunpack.c.l.b16 %v66
    %v363 = vunpack.c.l.b16 %v67
    %v364 = vunpack.c.l.b16 %v68
    %v365 = vunpack.c.l.b16 %v69
    %v366 = vunpack.c.l.b16 %v70
    %v367 = vunpack.c.l.b16 %v71
    %v368 = vunpack.c.l.b16 %v72
    %v369 = vunpack.c.l.b16 %v73
    %v370 = vunpack.c.l.b16 %v74
    %v371 = vunpack.c.l.b16 %v75
    %v372 = vunpack.c.l.b16 %v76
    %v373 = vunpack.c.l.b16 %v77
    %v374 = vunpack.c.l.b16 %v78
    %v375 = vunpack.c.l.b16 %v79
    %v376 = vunpack.c.l.b16 %v80
    %v377 = vunpack.c.l.b16 %v81
    %v378 = vunpack.c.l.b16 %v82
    %v379 = vunpack.c.l.b16 %v83
    %v380 = vunpack.c.l.b16 %v84
    %v381 = vunpack.c.l.b16 %v85
    %v382 = vunpack.c.l.b16 %v86
    %v383 = vunpack.c.l.b16 %v87
    %v384 = vunpack.c.l.b16 %v88
    %v385 = vunpack.c.l.b16 %v89
    %v386 = vunpack.c.l.b16 %v90
    %v387 = vunpack.c.l.b16 %v91
    %v388 = vunpack.c.l.b16 %v92
    %v389 = vunpack.c.l.b16 %v93
    %v390 = vunpack.c.l.b16 %v94
    %v391 = vunpack.c.l.b16 %v95
    %v392 = vunpack.c.l.b16 %v96
    %v393 = vunpack.c.l.b16 %v97
    %v394 = vunpack.c.l.b16 %v98
    %v395 = vunpack.c.l.b16 %v99
    %v396 = vunpack.c.l.b16 %v100
    %v397 = vunpack.c.l.b16 %v101
    %v398 = vunpack.c.l.b16 %v102
    %v399 = vunpack.c.l.b16 %v103
    %v400 = vunpack.c.l.b16 %v104
    %v401 = vunpack.c.l.b16 %v105
    %v402 = vunpack.c.l.b16 %v106
    %v403 = vunpack.c.l.b16 %v107
    %v404 = vunpack.c.l.b16 %v108
    %v405 = vunpack.c.l.b16 %v109
    %v406 = vunpack.c.l.b16 %v110
    %v407 = vunpack.c.l.b16 %v111
    %v408 = vunpack.c.l.b16 %v112
    %v409 = vunpack.c.l.b16 %v113
    %v410 = vunpack.c.l.b16 %v114
    %v411 = vunpack.c.l.b16 %v115
    %v412 = vunpack.c.l.b16 %v116
    %v413 = vunpack.c.l.b16 %v117
    %v414 = vunpack.c.l.b16 %v118
    %v415 = vunpack.c.l.b16 %v119
    %v416 = vunpack.c.l.b16 %v120
    %v417 = vunpack.c.l.b16 %v121
    %v418 = vunpack.c.l.b16 %v122
    %v419 = vunpack.c.l.b16 %v123
    %v420 = vunpack.c.l.b16 %v124
    %v421 = vunpack.c.l.b16 %v125
    %v422 = vunpack.c.l.b16 %v126
    %v423 = vunpack.c.l.b16 %v127
    %v424 = vunpack.c.l.b16 %v128
    %v425 = vunpack.c.l.b16 %v129
    %v426 = vunpack.c.l.b16 %v130
    %v427 = vunpack.c.l.b16 %v131
    %v428 = vunpack.c.l.b16 %v132
    %v429 = vunpack.c.l.b16 %v133
    %v430 = vunpack.c.l.b16 %v134
    %v431 = vunpack.c.l.b16 %v135
    %v432 = vunpack.c.l.b16 %v136
    %v433 = vunpack.c.l.b16 %v137
    %v434 = vunpack.c.l.b16 %v138
    %v435 = vunpack.c.l.b16 %v139
    %v436 = vunpack.c.l.b16 %v140
    %v437 = vunpack.c.l.b16 %v141
    %v438 = vunpack.c.l.b16 %v142
    %v439 = vunpack.c.l.b16 %v143
    %v440 = vunpack.c.l.b16 %v144
    %v441 = vunpack.c.l.b16 %v145
    %v442 = vunpack.c.l.b16 %v146
    %v443 = vunpack.c.l.b16 %v147
    %v444 = vunpack.c.l.b16 %v148
    %v445 = vunpack.c.l.b16 %v149
    %v446 = vunpack.c.l.b16 %v150
    %v447 = vunpack.c.l.b16 %v151
    %v448 = vunpack.c.l.b16 %v152
    %v449 = vunpack.c.l.b16 %v153
    %v450 = vunpack.c.l.b16 %v154
    %v451 = vunpack.c.l.b16 %v155
    %v452 = vunpack.c.l.b16 %v156
    %v453 = vunpack.c.l.b16 %v157
    %v454 = vunpack.c.l.b16 %v158
    %v455 = vunpack.c.l.b16 %v159
    %v456 = vunpack.c.l.b16 %v160
    %v457 = vunpack.c.l.b16 %v161
    %v458 = vunpack.c.l.b16 %v162
    %v459 = vunpack.c.l.b16 %v163
    %v460 = vunpack.c.l.b16 %v164
    %v461 = vunpack.c.l.b16 %v165
    %v462 = vunpack.c.l.b16 %v166
    %v463 = vunpack.c.l.b16 %v167
    %v464 = vunpack.c.l.b16 %v168
    %v465 = vunpack.c.l.b16 %v169
    %v466 = vunpack.c.l.b16 %v170
    %v467 = vunpack.c.l.b16 %v171
    %v468 = vunpack.c.l.b16 %v172
    %v469 = vpack.c.b16 %v342, %v341
    %v470 = vpack.c.b16 %v344, %v343
    %v471 = vpack.c.b16 %v346, %v345
    %v472 = vpack.c.b16 %v348, %v347
    %v473 = vpack.c.b16 %v350, %v349
    %v474 = vpack.c.b16 %v352, %v351
    %v475 = vpack.c.b16 %v354, %v353
    %v476 = vpack.c.b16 %v356, %v355
    %v477 = vpack.c.b16 %v358, %v357
    %v478 = vpack.c.b16 %v360, %v359
    %v479 = vpack.c.b16 %v362, %v361
    %v480 = vpack.c.b16 %v364, %v363
    %v481 = vpack.c.b16 %v366, %v365
    %v482 = vpack.c.b16 %v368, %v367
    %v483 = vpack.c.b16 %v370, %v369
    %v484 = vpack.c.b16 %v372, %v371
    %v485 = vpack.c.b16 %v374, %v373
    %v486 = vpack.c.b16 %v376, %v375
    %v487 = vpack.c.b16 %v378, %v377
    %v488 = vpack.c.b16 %v380, %v379
    %v489 = vpack.c.b16 %v382, %v381
    %v490 = vpack.c.b16 %v384, %v383
    %v491 = vpack.c.b16 %v386, %v385
    %v492 = vpack.c.b16 %v388, %v387
    %v493 = vpack.c.b16 %v390, %v389
    %v494 = vpack.c.b16 %v392, %v391
    %v495 = vpack.c.b16 %v394, %v393
    %v496 = vpack.c.b16 %v396, %v395
    %v497 = vpack.c.b16 %v398, %v397
    %v498 = vpack.c.b16 %v400, %v399
    %v499 = vpack.c.b16 %v402, %v401
    %v500 = vpack.c.b16 %v404, %v403
    %v501 = vpack.c.b16 %v406, %v405
    %v502 = vpack.c.b16 %v408, %v407
    %v503 = vpack.c.b16 %v410, %v409
    %v504 = vpack.c.b16 %v412, %v411
    %v505 = vpack.c.b16 %v414, %v413
    %v506 = vpack.c.b16 %v416, %v415
    %v507 = vpack.c.b16 %v418, %v417
    %v508 = vpack.c.b16 %v420, %v419
    %v509 = vpack.c.b16 %v422, %v421
    %v510 = vpack.c.b16 %v424, %v423
    %v511 = vpack.c.b16 %v426, %v425
    %v512 = vpack.c.b16 %v428, %v427
    %v513 = vpack.c.b16 %v430, %v429
    %v514 = vpack.c.b16 %v432, %v431
    %v515 = vpack.c.b16 %v434, %v433
    %v516 = vpack.c.b16 %v436, %v435
    %v517 = vpack.c.b16 %v438, %v437
    %v518 = vpack.c.b16 %v440, %v439
    %v519 = vpack.c.b16 %v442, %v441
    %v520 = vpack.c.b16 %v444, %v443
    %v521 = vpack.c.b16 %v446, %v445
    %v522 = vpack.c.b16 %v448, %v447
    %v523 = vpack.c.b16 %v450, %v449
    %v524 = vpack.c.b16 %v452, %v451
    %v525 = vpack.c.b16 %v454, %v453
    %v526 = vpack.c.b16 %v456, %v455
    %v527 = vpack.c.b16 %v458, %v457
    %v528 = vpack.c.b16 %v460, %v459
    %v529 = vpack.c.b16 %v462, %v461
    %v530 = vpack.c.b16 %v464, %v463
    %v531 = vpack.c.b16 %v466, %v465
    %v532 = vpack.c.b16 %v468, %v467
    %597 = vmatpush.bf16.msra.mxu0 %v476
    %598 = vmatpush.bf16.msra.mxu0 %v475
    %599 = vmatpush.bf16.msra.mxu0 %v474
    %600 = vmatpush.bf16.msra.mxu0 %v473
    %601 = vmatpush.bf16.msra.mxu0 %v472
    %602 = vmatpush.bf16.msra.mxu0 %v471
    %603 = vmatpush.bf16.msra.mxu0 %v470
    %604 = vmatpush.bf16.msra.mxu0 %v469
    %605 = vmatmul.bf16.gmra.mxu0 %v197
    %v606 = vpop.f32.mrf.mxu0
    %v607 = vadd.f32 0.0, %v606
    %v608 = vpop.f32.mrf.mxu0
    %v609 = vadd.f32 0.0, %v608
    %610 = vdwg.mxu0
    %611 = vmatpush.bf16.msra.mxu0 %v484
    %612 = vmatpush.bf16.msra.mxu0 %v483
    %613 = vmatpush.bf16.msra.mxu0 %v482
    %614 = vmatpush.bf16.msra.mxu0 %v481
    %615 = vmatpush.bf16.msra.mxu0 %v480
    %616 = vmatpush.bf16.msra.mxu0 %v479
    %617 = vmatpush.bf16.msra.mxu0 %v478
    %618 = vmatpush.bf16.msra.mxu0 %v477
    %619 = vmatmul.bf16.gmra.mxu0 %v198
    %v620 = vpop.f32.mrf.mxu0
    %v621 = vadd.f32 %v607, %v620
    %v622 = vpop.f32.mrf.mxu0
    %v623 = vadd.f32 %v609, %v622
    %624 = vdwg.mxu0
    %625 = vmatpush.bf16.msra.mxu0 %v492
    %626 = vmatpush.bf16.msra.mxu0 %v491
    %627 = vmatpush.bf16.msra.mxu0 %v490
    %628 = vmatpush.bf16.msra.mxu0 %v489
    %629 = vmatpush.bf16.msra.mxu0 %v488
    %630 = vmatpush.bf16.msra.mxu0 %v487
    %631 = vmatpush.bf16.msra.mxu0 %v486
    %632 = vmatpush.bf16.msra.mxu0 %v485
    %633 = vmatmul.bf16.gmra.mxu0 %v199
    %v634 = vpop.f32.mrf.mxu0
    %v635 = vadd.f32 %v621, %v634
    %v636 = vpop.f32.mrf.mxu0
    %v637 = vadd.f32 %v623, %v636
    %638 = vdwg.mxu0
    %639 = vmatpush.bf16.msra.mxu0 %v500
    %640 = vmatpush.bf16.msra.mxu0 %v499
    %641 = vmatpush.bf16.msra.mxu0 %v498
    %642 = vmatpush.bf16.msra.mxu0 %v497
    %643 = vmatpush.bf16.msra.mxu0 %v496
    %644 = vmatpush.bf16.msra.mxu0 %v495
    %645 = vmatpush.bf16.msra.mxu0 %v494
    %646 = vmatpush.bf16.msra.mxu0 %v493
    %647 = vmatmul.bf16.gmra.mxu0 %v200
    %v648 = vpop.f32.mrf.mxu0
    %v649 = vadd.f32 %v635, %v648
    %v650 = vpop.f32.mrf.mxu0
    %v651 = vadd.f32 %v637, %v650
    %652 = vdwg.mxu0
    %653 = vmatpush.bf16.msra.mxu0 %v508
    %654 = vmatpush.bf16.msra.mxu0 %v507
    %655 = vmatpush.bf16.msra.mxu0 %v506
    %656 = vmatpush.bf16.msra.mxu0 %v505
    %657 = vmatpush.bf16.msra.mxu0 %v504
    %658 = vmatpush.bf16.msra.mxu0 %v503
    %659 = vmatpush.bf16.msra.mxu0 %v502
    %660 = vmatpush.bf16.msra.mxu0 %v501
    %661 = vmatmul.bf16.gmra.mxu0 %v201
    %v662 = vpop.f32.mrf.mxu0
    %v663 = vadd.f32 %v649, %v662
    %v664 = vpop.f32.mrf.mxu0
    %v665 = vadd.f32 %v651, %v664
    %666 = vdwg.mxu0
    %667 = vmatpush.bf16.msra.mxu0 %v516
    %668 = vmatpush.bf16.msra.mxu0 %v515
    %669 = vmatpush.bf16.msra.mxu0 %v514
    %670 = vmatpush.bf16.msra.mxu0 %v513
    %671 = vmatpush.bf16.msra.mxu0 %v512
    %672 = vmatpush.bf16.msra.mxu0 %v511
    %673 = vmatpush.bf16.msra.mxu0 %v510
    %674 = vmatpush.bf16.msra.mxu0 %v509
    %675 = vmatmul.bf16.gmra.mxu0 %v202
    %v676 = vpop.f32.mrf.mxu0
    %v677 = vadd.f32 %v663, %v676
    %v678 = vpop.f32.mrf.mxu0
    %v679 = vadd.f32 %v665, %v678
    %680 = vdwg.mxu0
    %681 = vmatpush.bf16.msra.mxu0 %v524
    %682 = vmatpush.bf16.msra.mxu0 %v523
    %683 = vmatpush.bf16.msra.mxu0 %v522
    %684 = vmatpush.bf16.msra.mxu0 %v521
    %685 = vmatpush.bf16.msra.mxu0 %v520
    %686 = vmatpush.bf16.msra.mxu0 %v519
    %687 = vmatpush.bf16.msra.mxu0 %v518
    %688 = vmatpush.bf16.msra.mxu0 %v517
    %689 = vmatmul.bf16.gmra.mxu0 %v203
    %v690 = vpop.f32.mrf.mxu0
    %v691 = vadd.f32 %v677, %v690
    %v692 = vpop.f32.mrf.mxu0
    %v693 = vadd.f32 %v679, %v692
    %694 = vdwg.mxu0
    %695 = vmatpush.bf16.msra.mxu0 %v532
    %696 = vmatpush.bf16.msra.mxu0 %v531
    %697 = vmatpush.bf16.msra.mxu0 %v530
    %698 = vmatpush.bf16.msra.mxu0 %v529
    %699 = vmatpush.bf16.msra.mxu0 %v528
    %700 = vmatpush.bf16.msra.mxu0 %v527
    %701 = vmatpush.bf16.msra.mxu0 %v526
    %702 = vmatpush.bf16.msra.mxu0 %v525
    %703 = vmatmul.bf16.gmra.mxu0 %v204
    %v704 = vpop.f32.mrf.mxu0
    %v705 = vadd.f32 %v691, %v704
    %v706 = vpop.f32.mrf.mxu0
    %v707 = vadd.f32 %v693, %v706
    %708 = vdwg.mxu0
    %v709 = vadd.f32 %v35, %v705
    %v710 = vadd.f32 %v36, %v707
    %vm711 = vcmask 261120
    %712 = vst.msk [vmem:[#allocation2] sm:$0xff] %vm711, %v709
    %713 = vst.msk [vmem:[#allocation2 + $0x8] sm:$0xff] %vm711, %v710
    // Predicated region
    $region34: #{tpu_custom_call.1} parent=1 // pred_check
      %p714 = pneg %p28
    $region35: #{tpu_custom_call.1} parent=1 // pred_check_branch
      %716 = sbr.rel (%p714) target = $region37
    $region36: #{tpu_custom_call.1} parent=1 // pred_region
      %v717 = vld [vmem:[#allocation2] sm:$0xff]
      %v718 = vld [vmem:[#allocation2 + $0x8] sm:$0xff]
      %v719 = vld [vmem:[%s2] sm:$0x1]
      %v721 = vperm.slane %v719, 0
      %v723 = vadd.f32 %v717, %v721
      %v724 = vadd.f32 %v718, %v721
      %v725 = vpack.c.bf16 %v724, %v723
      %v726 = vld [vmem:[%s3] sm:$0xf]
      %v727 = vld [vmem:[%s3 + $0x10] sm:$0xf]
      %v728 = vld [vmem:[%s3 + $0x20] sm:$0xf]
      %v729 = vld [vmem:[%s3 + $0x30] sm:$0xf]
      %v730 = vld [vmem:[%s4] sm:$0x1]
      %v732 = vperm.slane %v730, 0
      %v738 = vunpack.c.l.b16 %v726
      %v739 = vunpack.c.l.b16 %v727
      %v740 = vunpack.c.l.b16 %v728
      %v741 = vunpack.c.l.b16 %v729
      %v742 = vpack.c.b16 %v739, %v738
      %v743 = vpack.c.b16 %v741, %v740
      %v747 = vsel %vm711, %v725, 0
      %749 = vmatpush.bf16.msra.mxu0 0
      %750 = vmatpush.bf16.msra.mxu0 0
      %751 = vmatpush.bf16.msra.mxu0 0
      %752 = vmatpush.bf16.msra.mxu0 0
      %753 = vmatpush.bf16.msra.mxu0 0
      %754 = vmatpush.bf16.msra.mxu0 0
      %755 = vmatpush.bf16.msra.mxu0 %v743
      %756 = vmatpush.bf16.msra.mxu0 %v742
      %757 = vmatmul.bf16.gmra.mxu0 %v747
      %v758 = vpop.f32.mrf.mxu0
      %v759 = vadd.f32 %v732, %v758
      %v760 = vpop.f32.mrf.mxu0
      %v761 = vadd.f32 %v732, %v760
      %762 = vdwg.mxu0
      %v763 = vmax.f32 %v759, 0.0
      %v764 = vmax.f32 %v761, 0.0
      %v765 = vpack.c.bf16 %v764, %v763
      %v766 = vld [vmem:[%s5] sm:$0xf]
      %v767 = vld [vmem:[%s5 + $0x4] sm:$0xf]
      %v768 = vld [vmem:[%s5 + $0x8] sm:$0xf]
      %v769 = vld [vmem:[%s5 + $0xc] sm:$0xf]
      %v770 = vld [vmem:[%s5 + $0x10] sm:$0xf]
      %v771 = vld [vmem:[%s5 + $0x14] sm:$0xf]
      %v772 = vld [vmem:[%s5 + $0x18] sm:$0xf]
      %v773 = vld [vmem:[%s5 + $0x1c] sm:$0xf]
      %v774 = vld [vmem:[%s5 + $0x20] sm:$0xf]
      %v775 = vld [vmem:[%s5 + $0x24] sm:$0xf]
      %v776 = vld [vmem:[%s5 + $0x28] sm:$0xf]
      %v777 = vld [vmem:[%s5 + $0x2c] sm:$0xf]
      %v778 = vld [vmem:[%s5 + $0x30] sm:$0xf]
      %v779 = vld [vmem:[%s5 + $0x34] sm:$0xf]
      %v780 = vld [vmem:[%s5 + $0x38] sm:$0xf]
      %v781 = vld [vmem:[%s5 + $0x3c] sm:$0xf]
      %v782 = vld [vmem:[%s3 + $0x4] sm:$0xf]
      %v783 = vld [vmem:[%s3 + $0x14] sm:$0xf]
      %v784 = vld [vmem:[%s3 + $0x24] sm:$0xf]
      %v785 = vld [vmem:[%s3 + $0x34] sm:$0xf]
      %v786 = vld [vmem:[%s4 + $0x1] sm:$0x1]
      %v788 = vperm.slane %v786, 0
      %v794 = vunpack.c.l.b16 %v782
      %v795 = vunpack.c.l.b16 %v783
      %v796 = vunpack.c.l.b16 %v784
      %v797 = vunpack.c.l.b16 %v785
      %v798 = vpack.c.b16 %v795, %v794
      %v799 = vpack.c.b16 %v797, %v796
      %802 = vmatpush.bf16.msra.mxu0 0
      %803 = vmatpush.bf16.msra.mxu0 0
      %804 = vmatpush.bf16.msra.mxu0 0
      %805 = vmatpush.bf16.msra.mxu0 0
      %806 = vmatpush.bf16.msra.mxu0 0
      %807 = vmatpush.bf16.msra.mxu0 0
      %808 = vmatpush.bf16.msra.mxu0 %v799
      %809 = vmatpush.bf16.msra.mxu0 %v798
      %810 = vmatmul.bf16.gmra.mxu0 %v747
      %v811 = vpop.f32.mrf.mxu0
      %v812 = vadd.f32 %v788, %v811
      %v813 = vpop.f32.mrf.mxu0
      %v814 = vadd.f32 %v788, %v813
      %815 = vdwg.mxu0
      %v816 = vmax.f32 %v812, 0.0
      %v817 = vmax.f32 %v814, 0.0
      %v818 = vpack.c.bf16 %v817, %v816
      %v819 = vld [vmem:[%s5 + $0x40] sm:$0xf]
      %v820 = vld [vmem:[%s5 + $0x44] sm:$0xf]
      %v821 = vld [vmem:[%s5 + $0x48] sm:$0xf]
      %v822 = vld [vmem:[%s5 + $0x4c] sm:$0xf]
      %v823 = vld [vmem:[%s5 + $0x50] sm:$0xf]
      %v824 = vld [vmem:[%s5 + $0x54] sm:$0xf]
      %v825 = vld [vmem:[%s5 + $0x58] sm:$0xf]
      %v826 = vld [vmem:[%s5 + $0x5c] sm:$0xf]
      %v827 = vld [vmem:[%s5 + $0x60] sm:$0xf]
      %v828 = vld [vmem:[%s5 + $0x64] sm:$0xf]
      %v829 = vld [vmem:[%s5 + $0x68] sm:$0xf]
      %v830 = vld [vmem:[%s5 + $0x6c] sm:$0xf]
      %v831 = vld [vmem:[%s5 + $0x70] sm:$0xf]
      %v832 = vld [vmem:[%s5 + $0x74] sm:$0xf]
      %v833 = vld [vmem:[%s5 + $0x78] sm:$0xf]
      %v834 = vld [vmem:[%s5 + $0x7c] sm:$0xf]
      %v851 = vunpack.c.l.b16 %v819
      %v852 = vunpack.c.l.b16 %v820
      %v853 = vunpack.c.l.b16 %v821
      %v854 = vunpack.c.l.b16 %v822
      %v855 = vunpack.c.l.b16 %v823
      %v856 = vunpack.c.l.b16 %v824
      %v857 = vunpack.c.l.b16 %v825
      %v858 = vunpack.c.l.b16 %v826
      %v859 = vunpack.c.l.b16 %v827
      %v860 = vunpack.c.l.b16 %v828
      %v861 = vunpack.c.l.b16 %v829
      %v862 = vunpack.c.l.b16 %v830
      %v863 = vunpack.c.l.b16 %v831
      %v864 = vunpack.c.l.b16 %v832
      %v865 = vunpack.c.l.b16 %v833
      %v866 = vunpack.c.l.b16 %v834
      %v867 = vpack.c.b16 %v852, %v851
      %v868 = vpack.c.b16 %v854, %v853
      %v869 = vpack.c.b16 %v856, %v855
      %v870 = vpack.c.b16 %v858, %v857
      %v871 = vpack.c.b16 %v860, %v859
      %v872 = vpack.c.b16 %v862, %v861
      %v873 = vpack.c.b16 %v864, %v863
      %v874 = vpack.c.b16 %v866, %v865
      %883 = vmatpush.bf16.msra.mxu0 %v874
      %884 = vmatpush.bf16.msra.mxu0 %v873
      %885 = vmatpush.bf16.msra.mxu0 %v872
      %886 = vmatpush.bf16.msra.mxu0 %v871
      %887 = vmatpush.bf16.msra.mxu0 %v870
      %888 = vmatpush.bf16.msra.mxu0 %v869
      %889 = vmatpush.bf16.msra.mxu0 %v868
      %890 = vmatpush.bf16.msra.mxu0 %v867
      %891 = vmatmul.bf16.gmra.mxu0 %v818
      %v892 = vpop.f32.mrf.mxu0
      %v893 = vadd.f32 0.0, %v892
      %v894 = vpop.f32.mrf.mxu0
      %v895 = vadd.f32 0.0, %v894
      %896 = vdwg.mxu0
      %v913 = vunpack.c.l.b16 %v766
      %v914 = vunpack.c.l.b16 %v767
      %v915 = vunpack.c.l.b16 %v768
      %v916 = vunpack.c.l.b16 %v769
      %v917 = vunpack.c.l.b16 %v770
      %v918 = vunpack.c.l.b16 %v771
      %v919 = vunpack.c.l.b16 %v772
      %v920 = vunpack.c.l.b16 %v773
      %v921 = vunpack.c.l.b16 %v774
      %v922 = vunpack.c.l.b16 %v775
      %v923 = vunpack.c.l.b16 %v776
      %v924 = vunpack.c.l.b16 %v777
      %v925 = vunpack.c.l.b16 %v778
      %v926 = vunpack.c.l.b16 %v779
      %v927 = vunpack.c.l.b16 %v780
      %v928 = vunpack.c.l.b16 %v781
      %v929 = vpack.c.b16 %v914, %v913
      %v930 = vpack.c.b16 %v916, %v915
      %v931 = vpack.c.b16 %v918, %v917
      %v932 = vpack.c.b16 %v920, %v919
      %v933 = vpack.c.b16 %v922, %v921
      %v934 = vpack.c.b16 %v924, %v923
      %v935 = vpack.c.b16 %v926, %v925
      %v936 = vpack.c.b16 %v928, %v927
      %945 = vmatpush.bf16.msra.mxu0 %v936
      %946 = vmatpush.bf16.msra.mxu0 %v935
      %947 = vmatpush.bf16.msra.mxu0 %v934
      %948 = vmatpush.bf16.msra.mxu0 %v933
      %949 = vmatpush.bf16.msra.mxu0 %v932
      %950 = vmatpush.bf16.msra.mxu0 %v931
      %951 = vmatpush.bf16.msra.mxu0 %v930
      %952 = vmatpush.bf16.msra.mxu0 %v929
      %953 = vmatmul.bf16.gmra.mxu0 %v765
      %v954 = vpop.f32.mrf.mxu0
      %v955 = vadd.f32 %v893, %v954
      %v956 = vpop.f32.mrf.mxu0
      %v957 = vadd.f32 %v895, %v956
      %958 = vdwg.mxu0
      %v959 = vld [vmem:[%s3 + $0x8] sm:$0xf]
      %v960 = vld [vmem:[%s3 + $0x18] sm:$0xf]
      %v961 = vld [vmem:[%s3 + $0x28] sm:$0xf]
      %v962 = vld [vmem:[%s3 + $0x38] sm:$0xf]
      %v963 = vld [vmem:[%s4 + $0x2] sm:$0x1]
      %v965 = vperm.slane %v963, 0
      %v971 = vunpack.c.l.b16 %v959
      %v972 = vunpack.c.l.b16 %v960
      %v973 = vunpack.c.l.b16 %v961
      %v974 = vunpack.c.l.b16 %v962
      %v975 = vpack.c.b16 %v972, %v971
      %v976 = vpack.c.b16 %v974, %v973
      %979 = vmatpush.bf16.msra.mxu0 0
      %980 = vmatpush.bf16.msra.mxu0 0
      %981 = vmatpush.bf16.msra.mxu0 0
      %982 = vmatpush.bf16.msra.mxu0 0
      %983 = vmatpush.bf16.msra.mxu0 0
      %984 = vmatpush.bf16.msra.mxu0 0
      %985 = vmatpush.bf16.msra.mxu0 %v976
      %986 = vmatpush.bf16.msra.mxu0 %v975
      %987 = vmatmul.bf16.gmra.mxu0 %v747
      %v988 = vpop.f32.mrf.mxu0
      %v989 = vadd.f32 %v965, %v988
      %v990 = vpop.f32.mrf.mxu0
      %v991 = vadd.f32 %v965, %v990
      %992 = vdwg.mxu0
      %v993 = vmax.f32 %v989, 0.0
      %v994 = vmax.f32 %v991, 0.0
      %v995 = vpack.c.bf16 %v994, %v993
      %v996 = vld [vmem:[%s5 + $0x80] sm:$0xf]
      %v997 = vld [vmem:[%s5 + $0x84] sm:$0xf]
      %v998 = vld [vmem:[%s5 + $0x88] sm:$0xf]
      %v999 = vld [vmem:[%s5 + $0x8c] sm:$0xf]
      %v1000 = vld [vmem:[%s5 + $0x90] sm:$0xf]
      %v1001 = vld [vmem:[%s5 + $0x94] sm:$0xf]
      %v1002 = vld [vmem:[%s5 + $0x98] sm:$0xf]
      %v1003 = vld [vmem:[%s5 + $0x9c] sm:$0xf]
      %v1004 = vld [vmem:[%s5 + $0xa0] sm:$0xf]
      %v1005 = vld [vmem:[%s5 + $0xa4] sm:$0xf]
      %v1006 = vld [vmem:[%s5 + $0xa8] sm:$0xf]
      %v1007 = vld [vmem:[%s5 + $0xac] sm:$0xf]
      %v1008 = vld [vmem:[%s5 + $0xb0] sm:$0xf]
      %v1009 = vld [vmem:[%s5 + $0xb4] sm:$0xf]
      %v1010 = vld [vmem:[%s5 + $0xb8] sm:$0xf]
      %v1011 = vld [vmem:[%s5 + $0xbc] sm:$0xf]
      %v1028 = vunpack.c.l.b16 %v996
      %v1029 = vunpack.c.l.b16 %v997
      %v1030 = vunpack.c.l.b16 %v998
      %v1031 = vunpack.c.l.b16 %v999
      %v1032 = vunpack.c.l.b16 %v1000
      %v1033 = vunpack.c.l.b16 %v1001
      %v1034 = vunpack.c.l.b16 %v1002
      %v1035 = vunpack.c.l.b16 %v1003
      %v1036 = vunpack.c.l.b16 %v1004
      %v1037 = vunpack.c.l.b16 %v1005
      %v1038 = vunpack.c.l.b16 %v1006
      %v1039 = vunpack.c.l.b16 %v1007
      %v1040 = vunpack.c.l.b16 %v1008
      %v1041 = vunpack.c.l.b16 %v1009
      %v1042 = vunpack.c.l.b16 %v1010
      %v1043 = vunpack.c.l.b16 %v1011
      %v1044 = vpack.c.b16 %v1029, %v1028
      %v1045 = vpack.c.b16 %v1031, %v1030
      %v1046 = vpack.c.b16 %v1033, %v1032
      %v1047 = vpack.c.b16 %v1035, %v1034
      %v1048 = vpack.c.b16 %v1037, %v1036
      %v1049 = vpack.c.b16 %v1039, %v1038
      %v1050 = vpack.c.b16 %v1041, %v1040
      %v1051 = vpack.c.b16 %v1043, %v1042
      %1060 = vmatpush.bf16.msra.mxu0 %v1051
      %1061 = vmatpush.bf16.msra.mxu0 %v1050
      %1062 = vmatpush.bf16.msra.mxu0 %v1049
      %1063 = vmatpush.bf16.msra.mxu0 %v1048
      %1064 = vmatpush.bf16.msra.mxu0 %v1047
      %1065 = vmatpush.bf16.msra.mxu0 %v1046
      %1066 = vmatpush.bf16.msra.mxu0 %v1045
      %1067 = vmatpush.bf16.msra.mxu0 %v1044
      %1068 = vmatmul.bf16.gmra.mxu0 %v995
      %v1069 = vpop.f32.mrf.mxu0
      %v1070 = vadd.f32 0.0, %v1069
      %v1071 = vpop.f32.mrf.mxu0
      %v1072 = vadd.f32 0.0, %v1071
      %1073 = vdwg.mxu0
      %v1074 = vadd.f32 %v955, %v1070
      %v1075 = vadd.f32 %v957, %v1072
      %v1076 = vld [vmem:[%s3 + $0xc] sm:$0xf]
      %v1077 = vld [vmem:[%s3 + $0x1c] sm:$0xf]
      %v1078 = vld [vmem:[%s3 + $0x2c] sm:$0xf]
      %v1079 = vld [vmem:[%s3 + $0x3c] sm:$0xf]
      %v1080 = vld [vmem:[%s4 + $0x3] sm:$0x1]
      %v1082 = vperm.slane %v1080, 0
      %v1088 = vunpack.c.l.b16 %v1076
      %v1089 = vunpack.c.l.b16 %v1077
      %v1090 = vunpack.c.l.b16 %v1078
      %v1091 = vunpack.c.l.b16 %v1079
      %v1092 = vpack.c.b16 %v1089, %v1088
      %v1093 = vpack.c.b16 %v1091, %v1090
      %1096 = vmatpush.bf16.msra.mxu0 0
      %1097 = vmatpush.bf16.msra.mxu0 0
      %1098 = vmatpush.bf16.msra.mxu0 0
      %1099 = vmatpush.bf16.msra.mxu0 0
      %1100 = vmatpush.bf16.msra.mxu0 0
      %1101 = vmatpush.bf16.msra.mxu0 0
      %1102 = vmatpush.bf16.msra.mxu0 %v1093
      %1103 = vmatpush.bf16.msra.mxu0 %v1092
      %1104 = vmatmul.bf16.gmra.mxu0 %v747
      %v1105 = vpop.f32.mrf.mxu0
      %v1106 = vadd.f32 %v1082, %v1105
      %v1107 = vpop.f32.mrf.mxu0
      %v1108 = vadd.f32 %v1082, %v1107
      %1109 = vdwg.mxu0
      %v1110 = vmax.f32 %v1106, 0.0
      %v1111 = vmax.f32 %v1108, 0.0
      %v1112 = vpack.c.bf16 %v1111, %v1110
      %v1113 = vld [vmem:[%s5 + $0xc0] sm:$0xf]
      %v1114 = vld [vmem:[%s5 + $0xc4] sm:$0xf]
      %v1115 = vld [vmem:[%s5 + $0xc8] sm:$0xf]
      %v1116 = vld [vmem:[%s5 + $0xcc] sm:$0xf]
      %v1117 = vld [vmem:[%s5 + $0xd0] sm:$0xf]
      %v1118 = vld [vmem:[%s5 + $0xd4] sm:$0xf]
      %v1119 = vld [vmem:[%s5 + $0xd8] sm:$0xf]
      %v1120 = vld [vmem:[%s5 + $0xdc] sm:$0xf]
      %v1121 = vld [vmem:[%s5 + $0xe0] sm:$0xf]
      %v1122 = vld [vmem:[%s5 + $0xe4] sm:$0xf]
      %v1123 = vld [vmem:[%s5 + $0xe8] sm:$0xf]
      %v1124 = vld [vmem:[%s5 + $0xec] sm:$0xf]
      %v1125 = vld [vmem:[%s5 + $0xf0] sm:$0xf]
      %v1126 = vld [vmem:[%s5 + $0xf4] sm:$0xf]
      %v1127 = vld [vmem:[%s5 + $0xf8] sm:$0xf]
      %v1128 = vld [vmem:[%s5 + $0xfc] sm:$0xf]
      %v1145 = vunpack.c.l.b16 %v1113
      %v1146 = vunpack.c.l.b16 %v1114
      %v1147 = vunpack.c.l.b16 %v1115
      %v1148 = vunpack.c.l.b16 %v1116
      %v1149 = vunpack.c.l.b16 %v1117
      %v1150 = vunpack.c.l.b16 %v1118
      %v1151 = vunpack.c.l.b16 %v1119
      %v1152 = vunpack.c.l.b16 %v1120
      %v1153 = vunpack.c.l.b16 %v1121
      %v1154 = vunpack.c.l.b16 %v1122
      %v1155 = vunpack.c.l.b16 %v1123
      %v1156 = vunpack.c.l.b16 %v1124
      %v1157 = vunpack.c.l.b16 %v1125
      %v1158 = vunpack.c.l.b16 %v1126
      %v1159 = vunpack.c.l.b16 %v1127
      %v1160 = vunpack.c.l.b16 %v1128
      %v1161 = vpack.c.b16 %v1146, %v1145
      %v1162 = vpack.c.b16 %v1148, %v1147
      %v1163 = vpack.c.b16 %v1150, %v1149
      %v1164 = vpack.c.b16 %v1152, %v1151
      %v1165 = vpack.c.b16 %v1154, %v1153
      %v1166 = vpack.c.b16 %v1156, %v1155
      %v1167 = vpack.c.b16 %v1158, %v1157
      %v1168 = vpack.c.b16 %v1160, %v1159
      %1177 = vmatpush.bf16.msra.mxu0 %v1168
      %1178 = vmatpush.bf16.msra.mxu0 %v1167
      %1179 = vmatpush.bf16.msra.mxu0 %v1166
      %1180 = vmatpush.bf16.msra.mxu0 %v1165
      %1181 = vmatpush.bf16.msra.mxu0 %v1164
      %1182 = vmatpush.bf16.msra.mxu0 %v1163
      %1183 = vmatpush.bf16.msra.mxu0 %v1162
      %1184 = vmatpush.bf16.msra.mxu0 %v1161
      %1185 = vmatmul.bf16.gmra.mxu0 %v1112
      %v1186 = vpop.f32.mrf.mxu0
      %v1187 = vadd.f32 0.0, %v1186
      %v1188 = vpop.f32.mrf.mxu0
      %v1189 = vadd.f32 0.0, %v1188
      %1190 = vdwg.mxu0
      %v1191 = vadd.f32 %v1074, %v1187
      %v1192 = vadd.f32 %v1075, %v1189
      %v1193 = vld [vmem:[%s6] sm:$0x1]
      %v1195 = vperm.slane %v1193, 0
      %v1197 = vadd.f32 %v1191, %v1195
      %v1198 = vadd.f32 %v1192, %v1195
      %1199 = vst [vmem:[#allocation3] sm:$0xff] %v1197
      %1200 = vst [vmem:[#allocation3 + $0x8] sm:$0xff] %v1198
    $region37: #{tpu_custom_call.1} parent=1 // pred_fallthru
      _
    // Predicated region
    $region38: #{tpu_custom_call.1} parent=1 // pred_check
      _
    $region39: #{tpu_custom_call.1} parent=1 // pred_check_branch
      %1202 = sbr.rel (0) target = $region41
    $region40: #{tpu_custom_call.1} parent=1 // pred_region
      %1204 = vsyncadd [#allocation4], 0
      %s1205 = sshll.u32 [#allocation3], 4
      %s1206 = int_to_ptr.vmem [resolvable:$true] %s1205
      %s1207 = sshll.u32 %s7, 4
      %s1208 = int_to_ptr.hbm [resolvable:$true] %s1207
      %1213 = dma.vmem_to_hbm [thread:$0]  %s1206, 256, %s1208, [#allocation4], 128, 128, 8
    $region41: #{tpu_custom_call.1} parent=1 // pred_fallthru
      _
    // Predicated region
    $region42: #{tpu_custom_call.1} parent=1 // pred_check
      _
    $region43: #{tpu_custom_call.1} parent=1 // pred_check_branch
      %1215 = sbr.rel (0) target = $region45
    $region44: #{tpu_custom_call.1} parent=1 // pred_region
      %1217 = dma.done [#allocation4], 256
    $region45: #{tpu_custom_call.1} parent=1 // pred_fallthru
      _
    %1218 = vsyncpa [#allocation4], 1

</llo_original>
